<compile_context>
chip_gen: v7x
topology: tpu7x:2x2x1
jax: 0.10.0
libtpu: 0.0.40
codegen_flags: <defaults>
</compile_context>

<pallas_src>
import functools

import jax
import jax.numpy as jnp
from jax import lax
from jax.experimental import pallas as pl
from jax.experimental.pallas import tpu as pltpu

_LANE = 512          # last-dim width presented to the kernel (multiple of 128)
_TARGET_ROWS = 512   # row-tile target (multiple of 8); ~1 MiB f32 per block


def _hash_u32(idx, seed):
    """Stateless per-element PRNG: mix (global index, seed) -> uniform u32."""
    h = idx ^ (seed * jnp.uint32(0x9E3779B9))
    # round 1: lowbias32 (Wellons)
    h = h ^ (h >> 16)
    h = h * jnp.uint32(0x7FEB352D)
    h = h ^ (h >> 15)
    h = h * jnp.uint32(0x846CA68B)
    h = h ^ (h >> 16)
    # round 2: murmur3 fmix32
    h = h ^ (h >> 16)
    h = h * jnp.uint32(0x85EBCA6B)
    h = h ^ (h >> 13)
    h = h * jnp.uint32(0xC2B2AE35)
    h = h ^ (h >> 16)
    return h


def _complex_dropout_kernel(seed_ref, r_ref, i_ref, or_ref, oi_ref, *,
                            threshold, scale, block_rows, lane):
    """seed_ref: SMEM int32[2] (seeds for the real / imag dropout masks)."""
    thr = jnp.uint32(threshold)
    scale_r = jnp.asarray(scale, dtype=r_ref.dtype)
    scale_i = jnp.asarray(scale, dtype=i_ref.dtype)

    # Global linear element index of every element in this tile (unique across
    # the whole array and across grid steps -> independent masks per tile).
    pid = pl.program_id(0).astype(jnp.uint32)
    row = lax.broadcasted_iota(jnp.uint32, (block_rows, lane), 0)
    col = lax.broadcasted_iota(jnp.uint32, (block_rows, lane), 1)
    gidx = pid * jnp.uint32(block_rows * lane) + row * jnp.uint32(lane) + col

    seed_r = seed_ref[0].astype(jnp.uint32)
    seed_i = seed_ref[1].astype(jnp.uint32)

    # Real part: keep with prob 1-p, scale survivors by 1/(1-p).
    bits_r = _hash_u32(gidx, seed_r)
    xr = r_ref[...]
    or_ref[...] = jnp.where(bits_r >= thr, xr * scale_r, jnp.zeros_like(xr))

    # Imaginary part: independent mask (different derived seed).
    bits_i = _hash_u32(gidx, seed_i)
    xi = i_ref[...]
    oi_ref[...] = jnp.where(bits_i >= thr, xi * scale_i, jnp.zeros_like(xi))


def complex_dropout(input_r, input_i, *, p=0.5, seed=0, training=True):
    """Pallas equivalent of ComplexDropout.forward(input_r, input_i)."""
    assert input_r.shape == input_i.shape
    if (not training) or p == 0.0:
        return input_r, input_i
    if p >= 1.0:
        return jnp.zeros_like(input_r), jnp.zeros_like(input_i)

    orig_shape = input_r.shape
    total = int(input_r.size)

    # Lane-dense slab layout: (rows_padded, _LANE), padded so every block is full.
    rows = -(-total // _LANE)
    block_rows = min(_TARGET_ROWS, rows)
    num_blocks = -(-rows // block_rows)
    rows_padded = num_blocks * block_rows
    padded_total = rows_padded * _LANE

    def to_slab(x):
        flat = x.reshape(-1)
        if padded_total != total:
            flat = jnp.pad(flat, (0, padded_total - total))
        return flat.reshape(rows_padded, _LANE)

    r2 = to_slab(input_r)
    i2 = to_slab(input_i)
    seeds = jnp.asarray([seed, seed + 1], dtype=jnp.int32)

    # Integer keep-threshold: keep iff bits >= p * 2^32  (keep-prob = 1 - p).
    threshold = min(int(round(p * (1 << 32))), (1 << 32) - 1)
    scale = 1.0 / (1.0 - p)

    kernel = functools.partial(
        _complex_dropout_kernel,
        threshold=threshold, scale=scale,
        block_rows=block_rows, lane=_LANE)

    spec = pl.BlockSpec((block_rows, _LANE), lambda g, s: (g, 0))
    out_r, out_i = pl.pallas_call(
        kernel,
        out_shape=(jax.ShapeDtypeStruct((rows_padded, _LANE), input_r.dtype),
                   jax.ShapeDtypeStruct((rows_padded, _LANE), input_i.dtype)),
        grid_spec=pltpu.PrefetchScalarGridSpec(
            num_scalar_prefetch=1,            # seeds land in SMEM
            grid=(num_blocks,),
            in_specs=[spec, spec],
            out_specs=[spec, spec],
        ),
        compiler_params=pltpu.CompilerParams(
            dimension_semantics=("parallel",)),   # lets v7x split rows over 2 TCs
    )(seeds, r2, i2)

    def from_slab(o):
        return o.reshape(-1)[:total].reshape(orig_shape)

    return from_slab(out_r), from_slab(out_i)


if __name__ == "__main__":
    key = jax.random.PRNGKey(0)
    kr, ki = jax.random.split(key)
    # NCHW, like the PyTorch module would consume.
    x_r = jax.random.normal(kr, (2, 4, 16, 16), dtype=jnp.float32)
    x_i = jax.random.normal(ki, (2, 4, 16, 16), dtype=jnp.float32)

    p = 0.5
    out_r, out_i = complex_dropout(x_r, x_i, p=p, seed=0, training=True)
    out_r = jax.block_until_ready(out_r)
    out_i = jax.block_until_ready(out_i)

    # Sanity: surviving elements equal input / (1 - p); zeros elsewhere.
    scale = 1.0 / (1.0 - p)
    for x, o in ((x_r, out_r), (x_i, out_i)):
        kept = o != 0.0
        assert o.shape == x.shape and o.dtype == x.dtype
        assert jnp.allclose(jnp.where(kept, o, 0.0),
                            jnp.where(kept, x * scale, 0.0),
                            rtol=1e-6, atol=1e-6)
        frac_kept = float(jnp.mean(kept.astype(jnp.float32)))
        assert 0.35 < frac_kept < 0.65  # roughly Bernoulli(1 - p)

    # Real and imaginary masks should be (mostly) independent, not identical.
    mask_r = (out_r != 0.0)
    mask_i = (out_i != 0.0)
    assert float(jnp.mean((mask_r == mask_i).astype(jnp.float32))) < 0.9

    print("KERNEL_OK")
</pallas_src>

<mosaic_0001>
module attributes {stable_mosaic.version = 11 : i64} {
  func.func @_complex_dropout_kernel(%arg0: i32, %arg1: memref<2xi32, #tpu.memory_space<smem>>, %arg2: memref<4x512xf32, #tpu.memory_space<vmem>>, %arg3: memref<4x512xf32, #tpu.memory_space<vmem>>, %arg4: memref<4x512xf32, #tpu.memory_space<vmem>>, %arg5: memref<4x512xf32, #tpu.memory_space<vmem>>) attributes {dimension_semantics = [#tpu.dimension_semantics<parallel>], iteration_bounds = array<i64: 1>, scalar_prefetch = 1 : i64, scratch_operands = 0 : i64, tpu.core_type = #tpu.core_type<tc>, window_params = [{transform_indices = @transform_0, window_bounds = array<i64: 4, 512>}, {transform_indices = @transform_1, window_bounds = array<i64: 4, 512>}, {transform_indices = @transform_2, window_bounds = array<i64: 4, 512>}, {transform_indices = @transform_3, window_bounds = array<i64: 4, 512>}]} {
    %0 = tpu.iota {dimensions = array<i32: 0>} : vector<4x512xi32>
    %1 = tpu.iota {dimensions = array<i32: 1>} : vector<4x512xi32>
    %c2048_i32 = arith.constant 2048 : i32
    %2 = arith.muli %arg0, %c2048_i32 : i32
    %c512_i32 = arith.constant 512 : i32
    %3 = vector.broadcast %c512_i32 : i32 to vector<4x512xi32>
    %4 = arith.muli %0, %3 : vector<4x512xi32>
    %5 = vector.broadcast %2 : i32 to vector<4x512xi32>
    %6 = arith.addi %5, %4 : vector<4x512xi32>
    %7 = arith.addi %6, %1 : vector<4x512xi32>
    %c0 = arith.constant 0 : index
    %8 = memref.load %arg1[%c0] : memref<2xi32, #tpu.memory_space<smem>>
    %c1 = arith.constant 1 : index
    %9 = memref.load %arg1[%c1] : memref<2xi32, #tpu.memory_space<smem>>
    %c-1640531527_i32 = arith.constant -1640531527 : i32
    %10 = arith.muli %8, %c-1640531527_i32 : i32
    %11 = vector.broadcast %10 : i32 to vector<4x512xi32>
    %12 = arith.xori %7, %11 : vector<4x512xi32>
    %c16_i32 = arith.constant 16 : i32
    %13 = vector.broadcast %c16_i32 : i32 to vector<4x512xi32>
    %14 = arith.shrui %12, %13 : vector<4x512xi32>
    %15 = arith.xori %12, %14 : vector<4x512xi32>
    %c2146121005_i32 = arith.constant 2146121005 : i32
    %16 = vector.broadcast %c2146121005_i32 : i32 to vector<4x512xi32>
    %17 = arith.muli %15, %16 : vector<4x512xi32>
    %c15_i32 = arith.constant 15 : i32
    %18 = vector.broadcast %c15_i32 : i32 to vector<4x512xi32>
    %19 = arith.shrui %17, %18 : vector<4x512xi32>
    %20 = arith.xori %17, %19 : vector<4x512xi32>
    %c-2073254261_i32 = arith.constant -2073254261 : i32
    %21 = vector.broadcast %c-2073254261_i32 : i32 to vector<4x512xi32>
    %22 = arith.muli %20, %21 : vector<4x512xi32>
    %c16_i32_0 = arith.constant 16 : i32
    %23 = vector.broadcast %c16_i32_0 : i32 to vector<4x512xi32>
    %24 = arith.shrui %22, %23 : vector<4x512xi32>
    %25 = arith.xori %22, %24 : vector<4x512xi32>
    %c16_i32_1 = arith.constant 16 : i32
    %26 = vector.broadcast %c16_i32_1 : i32 to vector<4x512xi32>
    %27 = arith.shrui %25, %26 : vector<4x512xi32>
    %28 = arith.xori %25, %27 : vector<4x512xi32>
    %c-2048144789_i32 = arith.constant -2048144789 : i32
    %29 = vector.broadcast %c-2048144789_i32 : i32 to vector<4x512xi32>
    %30 = arith.muli %28, %29 : vector<4x512xi32>
    %c13_i32 = arith.constant 13 : i32
    %31 = vector.broadcast %c13_i32 : i32 to vector<4x512xi32>
    %32 = arith.shrui %30, %31 : vector<4x512xi32>
    %33 = arith.xori %30, %32 : vector<4x512xi32>
    %c-1028477387_i32 = arith.constant -1028477387 : i32
    %34 = vector.broadcast %c-1028477387_i32 : i32 to vector<4x512xi32>
    %35 = arith.muli %33, %34 : vector<4x512xi32>
    %c16_i32_2 = arith.constant 16 : i32
    %36 = vector.broadcast %c16_i32_2 : i32 to vector<4x512xi32>
    %37 = arith.shrui %35, %36 : vector<4x512xi32>
    %38 = arith.xori %35, %37 : vector<4x512xi32>
    %c0_3 = arith.constant 0 : index
    %c0_4 = arith.constant 0 : index
    %39 = vector.load %arg2[%c0_3, %c0_4] : memref<4x512xf32, #tpu.memory_space<vmem>>, vector<4x512xf32>
    %c-2147483648_i32 = arith.constant -2147483648 : i32
    %40 = vector.broadcast %c-2147483648_i32 : i32 to vector<4x512xi32>
    %41 = arith.cmpi uge, %38, %40 : vector<4x512xi32>
    %cst = arith.constant 2.000000e+00 : f32
    %42 = vector.broadcast %cst : f32 to vector<4x512xf32>
    %43 = arith.mulf %39, %42 : vector<4x512xf32>
    %cst_5 = arith.constant 0.000000e+00 : f32
    %44 = vector.broadcast %cst_5 : f32 to vector<4x512xf32>
    %45 = arith.select %41, %43, %44 : vector<4x512xi1>, vector<4x512xf32>
    %c0_6 = arith.constant 0 : index
    %c0_7 = arith.constant 0 : index
    %46 = vector.load %arg4[%c0_6, %c0_7] : memref<4x512xf32, #tpu.memory_space<vmem>>, vector<4x512xf32>
    tpu.vector_store %arg4[%c0_6, %c0_7], %45 {strides = array<i32>} : memref<4x512xf32, #tpu.memory_space<vmem>>, vector<4x512xf32>,
    %c-1640531527_i32_8 = arith.constant -1640531527 : i32
    %47 = arith.muli %9, %c-1640531527_i32_8 : i32
    %48 = vector.broadcast %47 : i32 to vector<4x512xi32>
    %49 = arith.xori %7, %48 : vector<4x512xi32>
    %c16_i32_9 = arith.constant 16 : i32
    %50 = vector.broadcast %c16_i32_9 : i32 to vector<4x512xi32>
    %51 = arith.shrui %49, %50 : vector<4x512xi32>
    %52 = arith.xori %49, %51 : vector<4x512xi32>
    %c2146121005_i32_10 = arith.constant 2146121005 : i32
    %53 = vector.broadcast %c2146121005_i32_10 : i32 to vector<4x512xi32>
    %54 = arith.muli %52, %53 : vector<4x512xi32>
    %c15_i32_11 = arith.constant 15 : i32
    %55 = vector.broadcast %c15_i32_11 : i32 to vector<4x512xi32>
    %56 = arith.shrui %54, %55 : vector<4x512xi32>
    %57 = arith.xori %54, %56 : vector<4x512xi32>
    %c-2073254261_i32_12 = arith.constant -2073254261 : i32
    %58 = vector.broadcast %c-2073254261_i32_12 : i32 to vector<4x512xi32>
    %59 = arith.muli %57, %58 : vector<4x512xi32>
    %c16_i32_13 = arith.constant 16 : i32
    %60 = vector.broadcast %c16_i32_13 : i32 to vector<4x512xi32>
    %61 = arith.shrui %59, %60 : vector<4x512xi32>
    %62 = arith.xori %59, %61 : vector<4x512xi32>
    %c16_i32_14 = arith.constant 16 : i32
    %63 = vector.broadcast %c16_i32_14 : i32 to vector<4x512xi32>
    %64 = arith.shrui %62, %63 : vector<4x512xi32>
    %65 = arith.xori %62, %64 : vector<4x512xi32>
    %c-2048144789_i32_15 = arith.constant -2048144789 : i32
    %66 = vector.broadcast %c-2048144789_i32_15 : i32 to vector<4x512xi32>
    %67 = arith.muli %65, %66 : vector<4x512xi32>
    %c13_i32_16 = arith.constant 13 : i32
    %68 = vector.broadcast %c13_i32_16 : i32 to vector<4x512xi32>
    %69 = arith.shrui %67, %68 : vector<4x512xi32>
    %70 = arith.xori %67, %69 : vector<4x512xi32>
    %c-1028477387_i32_17 = arith.constant -1028477387 : i32
    %71 = vector.broadcast %c-1028477387_i32_17 : i32 to vector<4x512xi32>
    %72 = arith.muli %70, %71 : vector<4x512xi32>
    %c16_i32_18 = arith.constant 16 : i32
    %73 = vector.broadcast %c16_i32_18 : i32 to vector<4x512xi32>
    %74 = arith.shrui %72, %73 : vector<4x512xi32>
    %75 = arith.xori %72, %74 : vector<4x512xi32>
    %c0_19 = arith.constant 0 : index
    %c0_20 = arith.constant 0 : index
    %76 = vector.load %arg3[%c0_19, %c0_20] : memref<4x512xf32, #tpu.memory_space<vmem>>, vector<4x512xf32>
    %c-2147483648_i32_21 = arith.constant -2147483648 : i32
    %77 = vector.broadcast %c-2147483648_i32_21 : i32 to vector<4x512xi32>
    %78 = arith.cmpi uge, %75, %77 : vector<4x512xi32>
    %cst_22 = arith.constant 2.000000e+00 : f32
    %79 = vector.broadcast %cst_22 : f32 to vector<4x512xf32>
    %80 = arith.mulf %76, %79 : vector<4x512xf32>
    %cst_23 = arith.constant 0.000000e+00 : f32
    %81 = vector.broadcast %cst_23 : f32 to vector<4x512xf32>
    %82 = arith.select %78, %80, %81 : vector<4x512xi1>, vector<4x512xf32>
    %c0_24 = arith.constant 0 : index
    %c0_25 = arith.constant 0 : index
    %83 = vector.load %arg5[%c0_24, %c0_25] : memref<4x512xf32, #tpu.memory_space<vmem>>, vector<4x512xf32>
    tpu.vector_store %arg5[%c0_24, %c0_25], %82 {strides = array<i32>} : memref<4x512xf32, #tpu.memory_space<vmem>>, vector<4x512xf32>,
    return
  }
  func.func @transform_0(%arg0: i32, %arg1: memref<2xi32, #tpu.memory_space<smem>>) -> (i32, i32) {
    %c0_i32 = arith.constant 0 : i32
    %c0_i32_0 = arith.constant 0 : i32
    return %arg0, %c0_i32 : i32, i32
  }
  func.func @transform_1(%arg0: i32, %arg1: memref<2xi32, #tpu.memory_space<smem>>) -> (i32, i32) {
    %c0_i32 = arith.constant 0 : i32
    %c0_i32_0 = arith.constant 0 : i32
    return %arg0, %c0_i32 : i32, i32
  }
  func.func @transform_2(%arg0: i32, %arg1: memref<2xi32, #tpu.memory_space<smem>>) -> (i32, i32) {
    %c0_i32 = arith.constant 0 : i32
    %c0_i32_0 = arith.constant 0 : i32
    return %arg0, %c0_i32 : i32, i32
  }
  func.func @transform_3(%arg0: i32, %arg1: memref<2xi32, #tpu.memory_space<smem>>) -> (i32, i32) {
    %c0_i32 = arith.constant 0 : i32
    %c0_i32_0 = arith.constant 0 : i32
    return %arg0, %c0_i32 : i32, i32
  }
}

</mosaic_0001>

<llo_original>
// kernel: tpu_custom_call.1
$region0: #{tpu_custom_call.1}
  #allocation0 [shape = 'u32[]', space=smem, size = 0x4, offset = 0x4, fixed_abs, tag = 'smem constant byte address 0x4 - core index']
  #allocation1 [shape = 'u32[144,128]{1,0:T(1,128)}', space=vmem, size = 0x12000, scoped, tag = 'internal scratch']
  #allocation2 [shape = 's32[1]{0}', space=sflag, size = 0x4, scoped, tag = 'scoped memory for tpu_custom_call.1']
  #allocation3 [shape = 'u8[512]{0}', space=smem, size = 0x200, scoped, tag = 'prefetched SMEM operand 0']
  %s0 = inlined_call_operand.hbm [shape: s32[2], index: 0, kind: input, shape index: {}]
  %s1 = inlined_call_operand.hbm [shape: f32[4,512], index: 1, kind: input, shape index: {}]
  %s2 = inlined_call_operand.hbm [shape: f32[4,512], index: 2, kind: input, shape index: {}]
  %s3 = inlined_call_operand.hbm [shape: f32[4,512], index: 3, kind: output, shape index: {0}]
  %s4 = inlined_call_operand.hbm [shape: f32[4,512], index: 4, kind: output, shape index: {1}]
  %5 = xla_tuple %s3, %s4
  %s6 = sld [smem:[#allocation0]]
  $region34: #{tpu_custom_call.1} parent=0
    _
  %s8 = ssub.s32 1, %s6
  %s9 = scalar_select 0, %s8, %s6
  %11 = dma.hbm_to_smem %s0, 16, [#allocation3], [#allocation2]
  %12 = dma.done [#allocation2], 16
  %13 = sfence
  $region1: #{tpu_custom_call.1} parent=0
    #allocation4 [shape = 'u8[8192]{0}', space=vmem, size = 0x2000, scoped, tag = 'input window, operand 1, single buffered']
    #allocation5 [shape = 's32[1]{0}', space=sflag, size = 0x4, scoped, tag = 'scoped memory for tpu_custom_call.1']
    #allocation6 [shape = 's32[1]{0}', space=sflag, size = 0x4, scoped, tag = 'scoped memory for tpu_custom_call.1']
    #allocation7 [shape = 'u8[8192]{0}', space=vmem, size = 0x2000, scoped, tag = 'input window, operand 2, single buffered']
    #allocation8 [shape = 's32[1]{0}', space=sflag, size = 0x4, scoped, tag = 'scoped memory for tpu_custom_call.1']
    #allocation9 [shape = 'u8[8192]{0}', space=vmem, size = 0x2000, scoped, tag = 'output window, operand 0, single buffered']
    #allocation10 [shape = 'u8[8192]{0}', space=vmem, size = 0x2000, scoped, tag = 'output window, operand 1, single buffered']
    #allocation11 [shape = 's32[1]{0}', space=sflag, size = 0x4, scoped, tag = 'scoped memory for tpu_custom_call.1']
    %14 = vsyncpa [#allocation5], 0
    %15 = vsyncpa [#allocation8], 0
    %16 = vsyncpa [#allocation6], 0
    %17 = vsyncpa [#allocation11], 0
    // Predicated region
    $region2: #{tpu_custom_call.1} parent=1 // pred_check
      _
    $region3: #{tpu_custom_call.1} parent=1 // pred_check_branch
      %19 = sbr.rel (0) target = $region5
    $region4: #{tpu_custom_call.1} parent=1 // pred_region
      %s21 = ssub.s32 256, 256
      %22 = vsyncadd [#allocation5], %s21
      %s24 = sshll.u32 [#allocation4], 4
      %s25 = int_to_ptr.vmem [resolvable:$true] %s24
      %27 = dma.hbm_to_vmem [thread:$0]  %s1, 256, %s25, [#allocation5]
    $region5: #{tpu_custom_call.1} parent=1 // pred_fallthru
      _
    // Predicated region
    $region6: #{tpu_custom_call.1} parent=1 // pred_check
      _
    $region7: #{tpu_custom_call.1} parent=1 // pred_check_branch
      %29 = sbr.rel (0) target = $region9
    $region8: #{tpu_custom_call.1} parent=1 // pred_region
      %s31 = ssub.s32 256, 256
      %32 = vsyncadd [#allocation8], %s31
      %s34 = sshll.u32 [#allocation7], 4
      %s35 = int_to_ptr.vmem [resolvable:$true] %s34
      %37 = dma.hbm_to_vmem [thread:$0]  %s2, 256, %s35, [#allocation8]
    $region9: #{tpu_custom_call.1} parent=1 // pred_fallthru
      _
    // Predicated region
    $region10: #{tpu_custom_call.1} parent=1 // pred_check
      _
    $region11: #{tpu_custom_call.1} parent=1 // pred_check_branch
      %39 = sbr.rel (0) target = $region13
    $region12: #{tpu_custom_call.1} parent=1 // pred_region
      %40 = dma.done [#allocation5], 256
    $region13: #{tpu_custom_call.1} parent=1 // pred_fallthru
      _
    // Predicated region
    $region14: #{tpu_custom_call.1} parent=1 // pred_check
      _
    $region15: #{tpu_custom_call.1} parent=1 // pred_check_branch
      %42 = sbr.rel (0) target = $region17
    $region16: #{tpu_custom_call.1} parent=1 // pred_region
      %43 = dma.done [#allocation8], 256
    $region17: #{tpu_custom_call.1} parent=1 // pred_fallthru
      _
    %v44 = vlaneseq
    %v45 = vshrl.u32 %v44, 7
    %v46 = vlaneseq
    %v47 = vand.u32 %v46, 127
    %v48 = vadd.s32 %v47, 128
    %v49 = vadd.s32 %v47, 256
    %v50 = vadd.s32 %v47, 384
    %s51 = smul.u32 0, 2048
    %v52 = vmul.u32 %v45, 512
    %v53 = vstv %s51
    %v54 = vadd.s32 %v53, %v52
    %v55 = vadd.s32 %v54, %v47
    %v56 = vadd.s32 %v54, %v48
    %v57 = vadd.s32 %v54, %v49
    %v58 = vadd.s32 %v54, %v50
    %s59 = sld [smem:[#allocation3]]
    %s60 = sld [smem:[#allocation3 + $0x1]]
    %s61 = smul.u32 %s59, 2654435769
    %v62 = vstv %s61
    %v63 = vxor.u32 %v55, %v62
    %v64 = vxor.u32 %v56, %v62
    %v65 = vxor.u32 %v57, %v62
    %v66 = vxor.u32 %v58, %v62
    %v67 = vshrl.u32 %v63, 16
    %v68 = vshrl.u32 %v64, 16
    %v69 = vshrl.u32 %v65, 16
    %v70 = vshrl.u32 %v66, 16
    %v71 = vxor.u32 %v63, %v67
    %v72 = vxor.u32 %v64, %v68
    %v73 = vxor.u32 %v65, %v69
    %v74 = vxor.u32 %v66, %v70
    %v75 = vmul.u32 %v71, 2146121005
    %v76 = vmul.u32 %v72, 2146121005
    %v77 = vmul.u32 %v73, 2146121005
    %v78 = vmul.u32 %v74, 2146121005
    %v79 = vshrl.u32 %v75, 15
    %v80 = vshrl.u32 %v76, 15
    %v81 = vshrl.u32 %v77, 15
    %v82 = vshrl.u32 %v78, 15
    %v83 = vxor.u32 %v75, %v79
    %v84 = vxor.u32 %v76, %v80
    %v85 = vxor.u32 %v77, %v81
    %v86 = vxor.u32 %v78, %v82
    %v87 = vmul.u32 %v83, 2221713035
    %v88 = vmul.u32 %v84, 2221713035
    %v89 = vmul.u32 %v85, 2221713035
    %v90 = vmul.u32 %v86, 2221713035
    %v91 = vshrl.u32 %v87, 16
    %v92 = vshrl.u32 %v88, 16
    %v93 = vshrl.u32 %v89, 16
    %v94 = vshrl.u32 %v90, 16
    %v95 = vxor.u32 %v87, %v91
    %v96 = vxor.u32 %v88, %v92
    %v97 = vxor.u32 %v89, %v93
    %v98 = vxor.u32 %v90, %v94
    %v99 = vshrl.u32 %v95, 16
    %v100 = vshrl.u32 %v96, 16
    %v101 = vshrl.u32 %v97, 16
    %v102 = vshrl.u32 %v98, 16
    %v103 = vxor.u32 %v95, %v99
    %v104 = vxor.u32 %v96, %v100
    %v105 = vxor.u32 %v97, %v101
    %v106 = vxor.u32 %v98, %v102
    %v107 = vmul.u32 %v103, 2246822507
    %v108 = vmul.u32 %v104, 2246822507
    %v109 = vmul.u32 %v105, 2246822507
    %v110 = vmul.u32 %v106, 2246822507
    %v111 = vshrl.u32 %v107, 13
    %v112 = vshrl.u32 %v108, 13
    %v113 = vshrl.u32 %v109, 13
    %v114 = vshrl.u32 %v110, 13
    %v115 = vxor.u32 %v107, %v111
    %v116 = vxor.u32 %v108, %v112
    %v117 = vxor.u32 %v109, %v113
    %v118 = vxor.u32 %v110, %v114
    %v119 = vmul.u32 %v115, 3266489909
    %v120 = vmul.u32 %v116, 3266489909
    %v121 = vmul.u32 %v117, 3266489909
    %v122 = vmul.u32 %v118, 3266489909
    %v123 = vshrl.u32 %v119, 16
    %v124 = vshrl.u32 %v120, 16
    %v125 = vshrl.u32 %v121, 16
    %v126 = vshrl.u32 %v122, 16
    %v127 = vxor.u32 %v119, %v123
    %v128 = vxor.u32 %v120, %v124
    %v129 = vxor.u32 %v121, %v125
    %v130 = vxor.u32 %v122, %v126
    %v131 = vld [vmem:[#allocation4] sm:$0xff]
    %v132 = vld [vmem:[#allocation4 + $0x8] sm:$0xff]
    %vm133 = vcmp.ge.u32.totalorder %v127, 2147483648
    %vm134 = vcmp.ge.u32.totalorder %v128, 2147483648
    %vm135 = vcmp.ge.u32.totalorder %v129, 2147483648
    %vm136 = vcmp.ge.u32.totalorder %v130, 2147483648
    %v137 = vmul.f32 %v131, 2.0
    %v138 = vmul.f32 %v132, 2.0
    %v141 = vcombine.high %v137, %v137
    %v142 = vcombine.high %v138, %v138
    %v145 = vsel %vm133, %v137, 0.0
    %v146 = vsel %vm134, %v141, 0.0
    %v147 = vsel %vm135, %v138, 0.0
    %v148 = vsel %vm136, %v142, 0.0
    %v153 = vcombine.low %v145, %v146
    %v154 = vcombine.low %v147, %v148
    %157 = vst [vmem:[#allocation9] sm:$0xff] %v153
    %158 = vst [vmem:[#allocation9 + $0x8] sm:$0xff] %v154
    %s159 = smul.u32 %s60, 2654435769
    %v160 = vstv %s159
    %v161 = vxor.u32 %v55, %v160
    %v162 = vxor.u32 %v56, %v160
    %v163 = vxor.u32 %v57, %v160
    %v164 = vxor.u32 %v58, %v160
    %v165 = vshrl.u32 %v161, 16
    %v166 = vshrl.u32 %v162, 16
    %v167 = vshrl.u32 %v163, 16
    %v168 = vshrl.u32 %v164, 16
    %v169 = vxor.u32 %v161, %v165
    %v170 = vxor.u32 %v162, %v166
    %v171 = vxor.u32 %v163, %v167
    %v172 = vxor.u32 %v164, %v168
    %v173 = vmul.u32 %v169, 2146121005
    %v174 = vmul.u32 %v170, 2146121005
    %v175 = vmul.u32 %v171, 2146121005
    %v176 = vmul.u32 %v172, 2146121005
    %v177 = vshrl.u32 %v173, 15
    %v178 = vshrl.u32 %v174, 15
    %v179 = vshrl.u32 %v175, 15
    %v180 = vshrl.u32 %v176, 15
    %v181 = vxor.u32 %v173, %v177
    %v182 = vxor.u32 %v174, %v178
    %v183 = vxor.u32 %v175, %v179
    %v184 = vxor.u32 %v176, %v180
    %v185 = vmul.u32 %v181, 2221713035
    %v186 = vmul.u32 %v182, 2221713035
    %v187 = vmul.u32 %v183, 2221713035
    %v188 = vmul.u32 %v184, 2221713035
    %v189 = vshrl.u32 %v185, 16
    %v190 = vshrl.u32 %v186, 16
    %v191 = vshrl.u32 %v187, 16
    %v192 = vshrl.u32 %v188, 16
    %v193 = vxor.u32 %v185, %v189
    %v194 = vxor.u32 %v186, %v190
    %v195 = vxor.u32 %v187, %v191
    %v196 = vxor.u32 %v188, %v192
    %v197 = vshrl.u32 %v193, 16
    %v198 = vshrl.u32 %v194, 16
    %v199 = vshrl.u32 %v195, 16
    %v200 = vshrl.u32 %v196, 16
    %v201 = vxor.u32 %v193, %v197
    %v202 = vxor.u32 %v194, %v198
    %v203 = vxor.u32 %v195, %v199
    %v204 = vxor.u32 %v196, %v200
    %v205 = vmul.u32 %v201, 2246822507
    %v206 = vmul.u32 %v202, 2246822507
    %v207 = vmul.u32 %v203, 2246822507
    %v208 = vmul.u32 %v204, 2246822507
    %v209 = vshrl.u32 %v205, 13
    %v210 = vshrl.u32 %v206, 13
    %v211 = vshrl.u32 %v207, 13
    %v212 = vshrl.u32 %v208, 13
    %v213 = vxor.u32 %v205, %v209
    %v214 = vxor.u32 %v206, %v210
    %v215 = vxor.u32 %v207, %v211
    %v216 = vxor.u32 %v208, %v212
    %v217 = vmul.u32 %v213, 3266489909
    %v218 = vmul.u32 %v214, 3266489909
    %v219 = vmul.u32 %v215, 3266489909
    %v220 = vmul.u32 %v216, 3266489909
    %v221 = vshrl.u32 %v217, 16
    %v222 = vshrl.u32 %v218, 16
    %v223 = vshrl.u32 %v219, 16
    %v224 = vshrl.u32 %v220, 16
    %v225 = vxor.u32 %v217, %v221
    %v226 = vxor.u32 %v218, %v222
    %v227 = vxor.u32 %v219, %v223
    %v228 = vxor.u32 %v220, %v224
    %v229 = vld [vmem:[#allocation7] sm:$0xff]
    %v230 = vld [vmem:[#allocation7 + $0x8] sm:$0xff]
    %vm231 = vcmp.ge.u32.totalorder %v225, 2147483648
    %vm232 = vcmp.ge.u32.totalorder %v226, 2147483648
    %vm233 = vcmp.ge.u32.totalorder %v227, 2147483648
    %vm234 = vcmp.ge.u32.totalorder %v228, 2147483648
    %v235 = vmul.f32 %v229, 2.0
    %v236 = vmul.f32 %v230, 2.0
    %v239 = vcombine.high %v235, %v235
    %v240 = vcombine.high %v236, %v236
    %v243 = vsel %vm231, %v235, 0.0
    %v244 = vsel %vm232, %v239, 0.0
    %v245 = vsel %vm233, %v236, 0.0
    %v246 = vsel %vm234, %v240, 0.0
    %v251 = vcombine.low %v243, %v244
    %v252 = vcombine.low %v245, %v246
    %255 = vst [vmem:[#allocation10] sm:$0xff] %v251
    %256 = vst [vmem:[#allocation10 + $0x8] sm:$0xff] %v252
    // Predicated region
    $region18: #{tpu_custom_call.1} parent=1 // pred_check
      _
    $region19: #{tpu_custom_call.1} parent=1 // pred_check_branch
      %258 = sbr.rel (0) target = $region21
    $region20: #{tpu_custom_call.1} parent=1 // pred_region
      %s260 = ssub.s32 256, 256
      %261 = vsyncadd [#allocation6], %s260
      %s263 = sshll.u32 [#allocation9], 4
      %s264 = int_to_ptr.vmem [resolvable:$true] %s263
      %266 = dma.vmem_to_hbm [thread:$0]  %s264, 256, %s3, [#allocation6]
    $region21: #{tpu_custom_call.1} parent=1 // pred_fallthru
      _
    // Predicated region
    $region22: #{tpu_custom_call.1} parent=1 // pred_check
      _
    $region23: #{tpu_custom_call.1} parent=1 // pred_check_branch
      %268 = sbr.rel (0) target = $region25
    $region24: #{tpu_custom_call.1} parent=1 // pred_region
      %s270 = ssub.s32 256, 256
      %271 = vsyncadd [#allocation11], %s270
      %s273 = sshll.u32 [#allocation10], 4
      %s274 = int_to_ptr.vmem [resolvable:$true] %s273
      %276 = dma.vmem_to_hbm [thread:$0]  %s274, 256, %s4, [#allocation11]
    $region25: #{tpu_custom_call.1} parent=1 // pred_fallthru
      _
    // Predicated region
    $region26: #{tpu_custom_call.1} parent=1 // pred_check
      _
    $region27: #{tpu_custom_call.1} parent=1 // pred_check_branch
      %278 = sbr.rel (0) target = $region29
    $region28: #{tpu_custom_call.1} parent=1 // pred_region
      %279 = dma.done [#allocation6], 256
    $region29: #{tpu_custom_call.1} parent=1 // pred_fallthru
      _
    // Predicated region
    $region30: #{tpu_custom_call.1} parent=1 // pred_check
      _
    $region31: #{tpu_custom_call.1} parent=1 // pred_check_branch
      %281 = sbr.rel (0) target = $region33
    $region32: #{tpu_custom_call.1} parent=1 // pred_region
      %282 = dma.done [#allocation11], 256
    $region33: #{tpu_custom_call.1} parent=1 // pred_fallthru
      _
    %283 = vsyncpa [#allocation5], 1
    %284 = vsyncpa [#allocation8], 1
    %285 = vsyncpa [#allocation6], 1
    %286 = vsyncpa [#allocation11], 1

</llo_original>
